<compile_context>
chip_gen: v6e
topology: v6e:2x2x1
jax: 0.10.0
libtpu: 0.0.40
codegen_flags: <defaults>
</compile_context>

<pallas_src>
import jax
import jax.numpy as jnp
from jax.experimental import pallas as pl
from jax.experimental.pallas import tpu as pltpu


_LANE = 128
_N_CLASSES = 2
_MAX_TILE_ROWS = 2048          # 2048 x 128 x 4B = 1 MiB per output buffer


def _uniform_from_counter(flat_idx_i32, seed_i32):
    """Counter-based hash -> uniform [0, 1) float32 (23-bit resolution)."""
    u16 = jnp.uint32(16)
    u15 = jnp.uint32(15)
    x = flat_idx_i32.astype(jnp.uint32) * jnp.uint32(0x9E3779B9)
    x = x + seed_i32.astype(jnp.uint32) * jnp.uint32(0x85EBCA6B)
    # lowbias32-style finalizer (Wang/Murmur family): xor-shift / multiply.
    x = x ^ (x >> u16)
    x = x * jnp.uint32(0x7FEB352D)
    x = x ^ (x >> u15)
    x = x * jnp.uint32(0x846CA68B)
    x = x ^ (x >> u16)
    # Keep 23 bits -> uniform [0, 1) at float32 mantissa resolution.
    bits23 = (x >> jnp.uint32(9)).astype(jnp.int32)
    return bits23.astype(jnp.float32) * jnp.float32(1.0 / (1 << 23))


def _rf_rand_exact_kernel(seed_ref, out_ref):
    """Tiny-batch path: fill the exact (batch, 2) output."""
    rows, cols = out_ref.shape
    r = jax.lax.broadcasted_iota(jnp.int32, (rows, cols), 0)
    c = jax.lax.broadcasted_iota(jnp.int32, (rows, cols), 1)
    flat = r * cols + c
    out_ref[...] = _uniform_from_counter(flat, seed_ref[0])


def _rf_rand_packed_kernel(seed_ref, out_ref):
    """Large-batch path: fill a lane-dense (tile_rows, 128) slab per grid step."""
    tile_rows, cols = out_ref.shape          # cols == _LANE
    base = pl.program_id(0) * (tile_rows * cols)
    r = jax.lax.broadcasted_iota(jnp.int32, (tile_rows, cols), 0)
    c = jax.lax.broadcasted_iota(jnp.int32, (tile_rows, cols), 1)
    flat = base + r * cols + c               # distinct global counter per element
    out_ref[...] = _uniform_from_counter(flat, seed_ref[0])


def random_forest_forward(x, seed=0):
    """Pallas implementation of RandomForestClassifier.forward (untrained path).

    Args:
        x: [batch, height, width] array (contents unused, like the PyTorch module).
        seed: Python int or traced int32 scalar.  Pass a traced value (e.g. a
            step counter) to get call-to-call variation under jit, mirroring how
            torch.rand advances global RNG state.

    Returns:
        [batch, 2] float32 array of uniform [0, 1) "class logits".
    """
    batch = x.shape[0]
    total = batch * _N_CLASSES
    seed_arr = jnp.asarray(seed, dtype=jnp.int32).reshape((1,))
    smem_spec = pl.BlockSpec(memory_space=pltpu.MemorySpace.SMEM)

    if total < _LANE:
        # Launch-overhead-bound regime: exact shape, no padding, no post-op.
        return pl.pallas_call(
            _rf_rand_exact_kernel,
            out_shape=jax.ShapeDtypeStruct((batch, _N_CLASSES), jnp.float32),
            in_specs=[smem_spec],
            out_specs=pl.BlockSpec(memory_space=pltpu.MemorySpace.VMEM),
        )(seed_arr)

    # Lane-dense packed output: exactly cdiv(total, 128) rows of 128 lanes,
    # holding the row-major flattened [batch, 2] data (unmasked full-lane stores).
    rows = pl.cdiv(total, _LANE)
    tile_rows = min(rows, _MAX_TILE_ROWS)
    grid = (pl.cdiv(rows, tile_rows),)
    packed = pl.pallas_call(
        _rf_rand_packed_kernel,
        out_shape=jax.ShapeDtypeStruct((rows, _LANE), jnp.float32),
        grid=grid,
        in_specs=[smem_spec],
        out_specs=pl.BlockSpec((tile_rows, _LANE), lambda i: (i, 0)),
        compiler_params=pltpu.CompilerParams(
            dimension_semantics=("parallel",)),
    )(seed_arr)

    flat = packed.reshape(-1)
    if total != rows * _LANE:
        flat = flat[:total]   # only when batch*2 isn't a multiple of 128
    return flat.reshape(batch, _N_CLASSES)   # metadata-only when aligned


if __name__ == "__main__":
    key = jax.random.PRNGKey(0)

    # Input shape implied by the module docstring: [batch_size, height, width].
    batch, height, width = 2, 16, 16
    x = jax.random.normal(key, (batch, height, width), dtype=jnp.float32)

    logits = jax.block_until_ready(random_forest_forward(x, seed=0))
    assert logits.shape == (batch, _N_CLASSES), logits.shape
    assert logits.dtype == jnp.float32, logits.dtype
    assert bool(jnp.all(logits >= 0.0)) and bool(jnp.all(logits < 1.0))

    # Different seed -> different draw (deterministic counter-based PRNG).
    logits2 = jax.block_until_ready(random_forest_forward(x, seed=1))
    assert bool(jnp.any(logits2 != logits))

    # Exercise the lane-dense packed path (batch * 2 >= 128, reshape-only epilogue).
    xb = jax.random.normal(key, (128, height, width), dtype=jnp.float32)
    logits_b = jax.block_until_ready(random_forest_forward(xb, seed=0))
    assert logits_b.shape == (128, _N_CLASSES), logits_b.shape
    assert bool(jnp.all(logits_b >= 0.0)) and bool(jnp.all(logits_b < 1.0))

    print("KERNEL_OK")
</pallas_src>

<mosaic_0001>
module attributes {stable_mosaic.version = 11 : i64} {
  func.func @_rf_rand_exact_kernel(%arg0: memref<1xi32, #tpu.memory_space<smem>>, %arg1: memref<2x2xf32, #tpu.memory_space<vmem>>) attributes {dimension_semantics = [], scalar_prefetch = 0 : i64, scratch_operands = 0 : i64, tpu.core_type = #tpu.core_type<tc>} {
    %0 = tpu.iota {dimensions = array<i32: 0>} : vector<2x2xi32>
    %1 = tpu.iota {dimensions = array<i32: 1>} : vector<2x2xi32>
    %c2_i32 = arith.constant 2 : i32
    %2 = vector.broadcast %c2_i32 : i32 to vector<2x2xi32>
    %3 = arith.muli %0, %2 : vector<2x2xi32>
    %4 = arith.addi %3, %1 : vector<2x2xi32>
    %c0 = arith.constant 0 : index
    %5 = memref.load %arg0[%c0] : memref<1xi32, #tpu.memory_space<smem>>
    %c-1640531527_i32 = arith.constant -1640531527 : i32
    %6 = vector.broadcast %c-1640531527_i32 : i32 to vector<2x2xi32>
    %7 = arith.muli %4, %6 : vector<2x2xi32>
    %c-2048144789_i32 = arith.constant -2048144789 : i32
    %8 = arith.muli %5, %c-2048144789_i32 : i32
    %9 = vector.broadcast %8 : i32 to vector<2x2xi32>
    %10 = arith.addi %7, %9 : vector<2x2xi32>
    %c16_i32 = arith.constant 16 : i32
    %11 = vector.broadcast %c16_i32 : i32 to vector<2x2xi32>
    %12 = arith.shrui %10, %11 : vector<2x2xi32>
    %13 = arith.xori %10, %12 : vector<2x2xi32>
    %c2146121005_i32 = arith.constant 2146121005 : i32
    %14 = vector.broadcast %c2146121005_i32 : i32 to vector<2x2xi32>
    %15 = arith.muli %13, %14 : vector<2x2xi32>
    %c15_i32 = arith.constant 15 : i32
    %16 = vector.broadcast %c15_i32 : i32 to vector<2x2xi32>
    %17 = arith.shrui %15, %16 : vector<2x2xi32>
    %18 = arith.xori %15, %17 : vector<2x2xi32>
    %c-2073254261_i32 = arith.constant -2073254261 : i32
    %19 = vector.broadcast %c-2073254261_i32 : i32 to vector<2x2xi32>
    %20 = arith.muli %18, %19 : vector<2x2xi32>
    %c16_i32_0 = arith.constant 16 : i32
    %21 = vector.broadcast %c16_i32_0 : i32 to vector<2x2xi32>
    %22 = arith.shrui %20, %21 : vector<2x2xi32>
    %23 = arith.xori %20, %22 : vector<2x2xi32>
    %c9_i32 = arith.constant 9 : i32
    %24 = vector.broadcast %c9_i32 : i32 to vector<2x2xi32>
    %25 = arith.shrui %23, %24 : vector<2x2xi32>
    %26 = arith.sitofp %25 : vector<2x2xi32> to vector<2x2xf32>
    %cst = arith.constant 1.1920929E-7 : f32
    %27 = vector.broadcast %cst : f32 to vector<2x2xf32>
    %28 = arith.mulf %26, %27 : vector<2x2xf32>
    %c0_1 = arith.constant 0 : index
    %c0_2 = arith.constant 0 : index
    %29 = vector.load %arg1[%c0_1, %c0_2] : memref<2x2xf32, #tpu.memory_space<vmem>>, vector<2x2xf32>
    tpu.vector_store %arg1[%c0_1, %c0_2], %28 {strides = array<i32>} : memref<2x2xf32, #tpu.memory_space<vmem>>, vector<2x2xf32>,
    return
  }
}

</mosaic_0001>

<llo_original>
// kernel: tpu_custom_call.1
$region0: #{tpu_custom_call.1}
  #allocation0 [shape = 'u32[]', space=smem, size = 0x4, offset = 0x4, fixed_abs, tag = 'smem constant byte address 0x4 - core index']
  #allocation1 [shape = 'u32[144,128]{1,0:T(1,128)}', space=vmem, size = 0x12000, scoped, tag = 'internal scratch']
  #allocation2 [shape = 's32[1]{0:T(128)S(6)}', space=smem, size = 0x200, scoped, tag = 'scoped memory for tpu_custom_call.1']
  %s0 = inlined_call_operand.<no memory space> [shape: s32[1], index: 0, kind: input, shape index: {}]
  %s1 = inlined_call_operand.hbm [shape: f32[2,2], index: 1, kind: output, shape index: {}]
  %s2 = sld [smem:[#allocation0]]
  $region14: #{tpu_custom_call.1} parent=0
    _
  %s4 = ssub.s32 1, %s2
  %s5 = scalar_select 0, %s4, %s2
  %6 = sst [smem:[#allocation2]] %s0
  $region1: #{tpu_custom_call.1} parent=0
    #allocation3 [shape = 'u8[1024]{0}', space=vmem, size = 0x400, scoped, tag = 'output window, operand 0, single buffered']
    #allocation4 [shape = 's32[1]{0}', space=sflag, size = 0x4, scoped, tag = 'scoped memory for tpu_custom_call.1']
    %7 = vsyncpa [#allocation4], 0
    // Predicated region
    $region2: #{tpu_custom_call.1} parent=1 // pred_check
      _
    $region3: #{tpu_custom_call.1} parent=1 // pred_check_branch
      %9 = sbr.rel (0) target = $region5
    $region4: #{tpu_custom_call.1} parent=1 // pred_region
      _
    $region5: #{tpu_custom_call.1} parent=1 // pred_fallthru
      _
    %v10 = vlaneseq
    %v11 = vshrl.u32 %v10, 7
    %v12 = vlaneseq
    %v13 = vand.u32 %v12, 127
    %v14 = vmul.u32 %v11, 2
    %v15 = vadd.s32 %v14, %v13
    %s16 = sld [smem:[#allocation2]]
    %v17 = vmul.u32 %v15, 2654435769
    %s18 = smul.u32 %s16, 2246822507
    %v19 = vstv %s18
    %v20 = vadd.s32 %v17, %v19
    %v21 = vshrl.u32 %v20, 16
    %v22 = vxor.u32 %v20, %v21
    %v23 = vmul.u32 %v22, 2146121005
    %v24 = vshrl.u32 %v23, 15
    %v25 = vxor.u32 %v23, %v24
    %v26 = vmul.u32 %v25, 2221713035
    %v27 = vshrl.u32 %v26, 16
    %v28 = vxor.u32 %v26, %v27
    %v29 = vshrl.u32 %v28, 9
    %v30 = vcvt.s32.f32 %v29
    %v31 = vmul.f32 %v30, 1.1920929e-07
    %vm32 = vcmask 9216
    %33 = vst.msk [vmem:[#allocation3] sm:$0x3] %vm32, %v31
    // Predicated region
    $region6: #{tpu_custom_call.1} parent=1 // pred_check
      _
    $region7: #{tpu_custom_call.1} parent=1 // pred_check_branch
      %35 = sbr.rel (0) target = $region9
    $region8: #{tpu_custom_call.1} parent=1 // pred_region
      %s37 = ssub.s32 32, 32
      %38 = vsyncadd [#allocation4], %s37
      %s40 = sshll.u32 [#allocation3], 4
      %s41 = int_to_ptr.vmem [resolvable:$true] %s40
      %43 = dma.vmem_to_hbm [thread:$0]  %s41, 32, %s1, [#allocation4]
    $region9: #{tpu_custom_call.1} parent=1 // pred_fallthru
      _
    // Predicated region
    $region10: #{tpu_custom_call.1} parent=1 // pred_check
      _
    $region11: #{tpu_custom_call.1} parent=1 // pred_check_branch
      %45 = sbr.rel (0) target = $region13
    $region12: #{tpu_custom_call.1} parent=1 // pred_region
      %46 = dma.done [#allocation4], 32
    $region13: #{tpu_custom_call.1} parent=1 // pred_fallthru
      _
    %47 = vsyncpa [#allocation4], 1

</llo_original>
